<compile_context>
chip_gen: v5e
topology: v5e:2x2
jax: 0.10.0
libtpu: 0.0.40
codegen_flags: <defaults>
</compile_context>

<pallas_src>
import jax
import jax.numpy as jnp
from jax.experimental import pallas as pl
from jax.experimental.pallas import tpu as pltpu


def _leaky_relu(v, slope=0.01):
    return jnp.where(v > 0, v, slope * v)


def _round_up(v, m):
    return ((v + m - 1) // m) * m


def mlp_kernel(x_ref,
               w1_ref, b1_ref,
               w2_ref, b2_ref,
               w3_ref, b3_ref,
               w4_ref, b4_ref,
               o_ref):
    # x arrives as f32 straight from HBM; the bf16 cast rides on the otherwise-idle VPU.
    # All matmuls accumulate in f32 on the MXU; bias/activation epilogue stays f32.
    x = x_ref[...].astype(jnp.bfloat16)
    h = _leaky_relu(
        jnp.dot(x, w1_ref[...], preferred_element_type=jnp.float32) + b1_ref[...])
    h = _leaky_relu(
        jnp.dot(h.astype(jnp.bfloat16), w2_ref[...],
                preferred_element_type=jnp.float32) + b2_ref[...])
    h = _leaky_relu(
        jnp.dot(h.astype(jnp.bfloat16), w3_ref[...],
                preferred_element_type=jnp.float32) + b3_ref[...])
    out = jnp.dot(h.astype(jnp.bfloat16), w4_ref[...],
                  preferred_element_type=jnp.float32) + b4_ref[...]
    # bf16 writeback halves the dominant HBM stream (lane-dense 128-wide padded output).
    o_ref[...] = out.astype(o_ref.dtype)


def prepare_params(params):
    """One-time cast/pad of the (tiny) weights so the per-call wrapper adds no extra XLA ops.

    params: dict with w1..w4 of shape (in, out) and b1..b4 of shape (1, out)
            (weights stored transposed vs. PyTorch, so each layer is x @ W + b).
    """
    out_size = params["w4"].shape[1]
    n_pad = _round_up(out_size, 128)  # lane-dense final layer; sliced back outside
    return {
        "w1": params["w1"].astype(jnp.bfloat16),
        "w2": params["w2"].astype(jnp.bfloat16),
        "w3": params["w3"].astype(jnp.bfloat16),
        "w4": jnp.pad(params["w4"].astype(jnp.bfloat16),
                      ((0, 0), (0, n_pad - out_size))),
        "b1": params["b1"].astype(jnp.float32),
        "b2": params["b2"].astype(jnp.float32),
        "b3": params["b3"].astype(jnp.float32),
        "b4": jnp.pad(params["b4"].astype(jnp.float32),
                      ((0, 0), (0, n_pad - out_size))),
        "out_size": out_size,
    }


def nn_algo_forward(x, prepped, *, batch_tile=None):
    """Pallas forward pass of NN_algo_model.

    x: (B, input_size) float32
    prepped: output of prepare_params()
    Returns (B, output_size) float32.
    """
    B, in_size = x.shape
    out_size = prepped["out_size"]
    n_pad = prepped["w4"].shape[1]

    # --- batch-tile heuristic (padding-aware + megacore-aware) ---------------------------
    if batch_tile is None:
        if B <= 1024:
            # Single padding-minimal tile (bf16 intermediates -> align to 16 sublanes).
            batch_tile = max(16, _round_up(B, 16))
        else:
            # 512..2048-row tiles, but guarantee >= 4 grid steps so each v7x TensorCore
            # gets >= 2 software-pipelined steps.
            n_steps = max(4, pl.cdiv(B, 2048))
            batch_tile = min(2048, max(512, _round_up(pl.cdiv(B, n_steps), 128)))
    assert batch_tile % 8 == 0, "batch_tile must be a multiple of 8"

    B_pad = _round_up(B, batch_tile)
    if B_pad != B:
        x = jnp.pad(x, ((0, B_pad - B), (0, 0)))
    num_tiles = B_pad // batch_tile

    # Deeper pipelining on the two big streams once there are enough grid steps.
    pipe_kwargs = {"pipeline_mode": pl.Buffered(3)} if num_tiles >= 3 else {}

    w1, w2, w3, w4 = prepped["w1"], prepped["w2"], prepped["w3"], prepped["w4"]
    b1, b2, b3, b4 = prepped["b1"], prepped["b2"], prepped["b3"], prepped["b4"]

    def full_spec(shape):
        # Whole (small) array as one block, same block every grid step (VMEM-resident).
        return pl.BlockSpec(shape, lambda i: (0, 0))

    flops = 2 * B_pad * (in_size * 128 + 128 * 64 + 64 * 32 + 32 * n_pad)
    bytes_accessed = (
        x.size * 4                                                  # f32 x read
        + (w1.size + w2.size + w3.size + w4.size) * 2               # bf16 weights
        + (b1.size + b2.size + b3.size + b4.size) * 4               # f32 biases
        + B_pad * n_pad * 2                                         # bf16 output writeback
    )
    cost = pl.CostEstimate(flops=flops, transcendentals=0,
                           bytes_accessed=bytes_accessed)

    out_padded = pl.pallas_call(
        mlp_kernel,
        out_shape=jax.ShapeDtypeStruct((B_pad, n_pad), jnp.bfloat16),
        grid_spec=pltpu.PrefetchScalarGridSpec(
            num_scalar_prefetch=0,
            grid=(num_tiles,),
            in_specs=[
                pl.BlockSpec((batch_tile, in_size), lambda i: (i, 0), **pipe_kwargs),
                full_spec(w1.shape), full_spec(b1.shape),
                full_spec(w2.shape), full_spec(b2.shape),
                full_spec(w3.shape), full_spec(b3.shape),
                full_spec(w4.shape), full_spec(b4.shape),
            ],
            out_specs=pl.BlockSpec((batch_tile, n_pad), lambda i: (i, 0), **pipe_kwargs),
        ),
        compiler_params=pltpu.CompilerParams(
            dimension_semantics=("parallel",)),
        cost_estimate=cost,
    )(x, w1, b1, w2, b2, w3, b3, w4, b4)

    return out_padded[:B, :out_size].astype(jnp.float32)


def init_params(key, input_size, output_size):
    """Deterministic parameter init (uniform, PyTorch nn.Linear-style bounds)."""
    dims = [(input_size, 128), (128, 64), (64, 32), (32, output_size)]
    params = {}
    for idx, (fan_in, fan_out) in enumerate(dims, start=1):
        key, kw, kb = jax.random.split(key, 3)
        bound = 1.0 / (fan_in ** 0.5)
        params[f"w{idx}"] = jax.random.uniform(
            kw, (fan_in, fan_out), jnp.float32, -bound, bound)
        params[f"b{idx}"] = jax.random.uniform(
            kb, (1, fan_out), jnp.float32, -bound, bound)
    return params


def reference_forward(x, params):
    h = x
    for idx in range(1, 5):
        h = jnp.dot(h, params[f"w{idx}"]) + params[f"b{idx}"]
        if idx < 4:
            h = jnp.where(h > 0, h, 0.01 * h)
    return h


if __name__ == "__main__":
    # TODO(synk): CrossEntropyLoss criterion belongs to training, not forward(); omitted.
    key = jax.random.PRNGKey(0)
    input_size = 32
    output_size = 10

    params = init_params(key, input_size, output_size)
    prepped = prepare_params(params)   # one-time weight cast/pad

    # Case 1: tiny batch (single 16-row tile).
    key, kx = jax.random.split(key)
    x_small = jax.random.normal(kx, (8, input_size), dtype=jnp.float32)
    out_small = jax.block_until_ready(nn_algo_forward(x_small, prepped))
    ref_small = reference_forward(x_small, params)
    assert out_small.shape == (8, output_size)
    assert jnp.allclose(out_small, ref_small, atol=7e-2, rtol=7e-2), \
        "small-batch mismatch vs reference"

    # Case 2: ragged batch -> single padding-minimal tile (200 -> 208 rows, 4% dead).
    key, kx2 = jax.random.split(key)
    x_ragged = jax.random.normal(kx2, (200, input_size), dtype=jnp.float32)
    out_ragged = jax.block_until_ready(nn_algo_forward(x_ragged, prepped))
    ref_ragged = reference_forward(x_ragged, params)
    assert out_ragged.shape == (200, output_size)
    assert jnp.allclose(out_ragged, ref_ragged, atol=7e-2, rtol=7e-2), \
        "ragged-batch mismatch vs reference"

    # Case 3: larger batch -> multi-step grid (1536 = 4 x 384 tiles, Buffered(3) path,
    # megacore-shardable parallel axis).
    key, kx3 = jax.random.split(key)
    x_big = jax.random.normal(kx3, (1536, input_size), dtype=jnp.float32)
    out_big = jax.block_until_ready(nn_algo_forward(x_big, prepped))
    ref_big = reference_forward(x_big, params)
    assert out_big.shape == (1536, output_size)
    assert jnp.allclose(out_big, ref_big, atol=7e-2, rtol=7e-2), \
        "multi-tile batch mismatch vs reference"

    print("KERNEL_OK")
</pallas_src>

<mosaic_0001>
module attributes {stable_mosaic.version = 11 : i64} {
  func.func @mlp_kernel(%arg0: i32, %arg1: memref<16x32xf32, #tpu.memory_space<vmem>>, %arg2: memref<32x128xbf16, #tpu.memory_space<vmem>>, %arg3: memref<1x128xf32, #tpu.memory_space<vmem>>, %arg4: memref<128x64xbf16, #tpu.memory_space<vmem>>, %arg5: memref<1x64xf32, #tpu.memory_space<vmem>>, %arg6: memref<64x32xbf16, #tpu.memory_space<vmem>>, %arg7: memref<1x32xf32, #tpu.memory_space<vmem>>, %arg8: memref<32x128xbf16, #tpu.memory_space<vmem>>, %arg9: memref<1x128xf32, #tpu.memory_space<vmem>>, %arg10: memref<16x128xbf16, #tpu.memory_space<vmem>>) attributes {dimension_semantics = [#tpu.dimension_semantics<parallel>], iteration_bounds = array<i64: 1>, scalar_prefetch = 0 : i64, scratch_operands = 0 : i64, tpu.core_type = #tpu.core_type<tc>, window_params = [{transform_indices = @transform_0, window_bounds = array<i64: 16, 32>}, {pipeline_mode = #tpu.pipeline_mode<synchronous>, transform_indices = @transform_1, window_bounds = array<i64: 32, 128>}, {pipeline_mode = #tpu.pipeline_mode<synchronous>, transform_indices = @transform_2, window_bounds = array<i64: 1, 128>}, {pipeline_mode = #tpu.pipeline_mode<synchronous>, transform_indices = @transform_3, window_bounds = array<i64: 128, 64>}, {pipeline_mode = #tpu.pipeline_mode<synchronous>, transform_indices = @transform_4, window_bounds = array<i64: 1, 64>}, {pipeline_mode = #tpu.pipeline_mode<synchronous>, transform_indices = @transform_5, window_bounds = array<i64: 64, 32>}, {pipeline_mode = #tpu.pipeline_mode<synchronous>, transform_indices = @transform_6, window_bounds = array<i64: 1, 32>}, {pipeline_mode = #tpu.pipeline_mode<synchronous>, transform_indices = @transform_7, window_bounds = array<i64: 32, 128>}, {pipeline_mode = #tpu.pipeline_mode<synchronous>, transform_indices = @transform_8, window_bounds = array<i64: 1, 128>}, {transform_indices = @transform_9, window_bounds = array<i64: 16, 128>}]} {
    %c0 = arith.constant 0 : index
    %c0_0 = arith.constant 0 : index
    %0 = vector.load %arg1[%c0, %c0_0] : memref<16x32xf32, #tpu.memory_space<vmem>>, vector<16x32xf32>
    %1 = arith.truncf %0 : vector<16x32xf32> to vector<16x32xbf16>
    %c0_1 = arith.constant 0 : index
    %c0_2 = arith.constant 0 : index
    %2 = vector.load %arg2[%c0_1, %c0_2] : memref<32x128xbf16, #tpu.memory_space<vmem>>, vector<32x128xbf16>
    %cst = arith.constant dense<0.000000e+00> : vector<16x128xf32>
    %3 = tpu.matmul %1, %2, %cst {dimension_numbers = #tpu.dot_dimension_numbers<[1], [0], [0], [1], [0, 0, 1, 1], [], []>} : vector<16x32xbf16>, vector<32x128xbf16>, vector<16x128xf32> -> vector<16x128xf32>
    %c0_3 = arith.constant 0 : index
    %c0_4 = arith.constant 0 : index
    %4 = vector.load %arg3[%c0_3, %c0_4] : memref<1x128xf32, #tpu.memory_space<vmem>>, vector<1x128xf32>
    %5 = vector.broadcast %4 : vector<1x128xf32> to vector<16x128xf32>
    %6 = arith.addf %3, %5 : vector<16x128xf32>
    %cst_5 = arith.constant 0.000000e+00 : f32
    %7 = vector.broadcast %cst_5 : f32 to vector<16x128xf32>
    %8 = arith.cmpf ogt, %6, %7 : vector<16x128xf32>
    %cst_6 = arith.constant 0.00999999977 : f32
    %9 = vector.broadcast %cst_6 : f32 to vector<16x128xf32>
    %10 = arith.mulf %9, %6 : vector<16x128xf32>
    %11 = arith.select %8, %6, %10 : vector<16x128xi1>, vector<16x128xf32>
    %12 = arith.truncf %11 : vector<16x128xf32> to vector<16x128xbf16>
    %c0_7 = arith.constant 0 : index
    %c0_8 = arith.constant 0 : index
    %13 = vector.load %arg4[%c0_7, %c0_8] : memref<128x64xbf16, #tpu.memory_space<vmem>>, vector<128x64xbf16>
    %cst_9 = arith.constant dense<0.000000e+00> : vector<16x64xf32>
    %14 = tpu.matmul %12, %13, %cst_9 {dimension_numbers = #tpu.dot_dimension_numbers<[1], [0], [0], [1], [0, 0, 1, 1], [], []>} : vector<16x128xbf16>, vector<128x64xbf16>, vector<16x64xf32> -> vector<16x64xf32>
    %c0_10 = arith.constant 0 : index
    %c0_11 = arith.constant 0 : index
    %15 = vector.load %arg5[%c0_10, %c0_11] : memref<1x64xf32, #tpu.memory_space<vmem>>, vector<1x64xf32>
    %16 = vector.broadcast %15 : vector<1x64xf32> to vector<16x64xf32>
    %17 = arith.addf %14, %16 : vector<16x64xf32>
    %cst_12 = arith.constant 0.000000e+00 : f32
    %18 = vector.broadcast %cst_12 : f32 to vector<16x64xf32>
    %19 = arith.cmpf ogt, %17, %18 : vector<16x64xf32>
    %cst_13 = arith.constant 0.00999999977 : f32
    %20 = vector.broadcast %cst_13 : f32 to vector<16x64xf32>
    %21 = arith.mulf %20, %17 : vector<16x64xf32>
    %22 = arith.select %19, %17, %21 : vector<16x64xi1>, vector<16x64xf32>
    %23 = arith.truncf %22 : vector<16x64xf32> to vector<16x64xbf16>
    %c0_14 = arith.constant 0 : index
    %c0_15 = arith.constant 0 : index
    %24 = vector.load %arg6[%c0_14, %c0_15] : memref<64x32xbf16, #tpu.memory_space<vmem>>, vector<64x32xbf16>
    %cst_16 = arith.constant dense<0.000000e+00> : vector<16x32xf32>
    %25 = tpu.matmul %23, %24, %cst_16 {dimension_numbers = #tpu.dot_dimension_numbers<[1], [0], [0], [1], [0, 0, 1, 1], [], []>} : vector<16x64xbf16>, vector<64x32xbf16>, vector<16x32xf32> -> vector<16x32xf32>
    %c0_17 = arith.constant 0 : index
    %c0_18 = arith.constant 0 : index
    %26 = vector.load %arg7[%c0_17, %c0_18] : memref<1x32xf32, #tpu.memory_space<vmem>>, vector<1x32xf32>
    %27 = vector.broadcast %26 : vector<1x32xf32> to vector<16x32xf32>
    %28 = arith.addf %25, %27 : vector<16x32xf32>
    %cst_19 = arith.constant 0.000000e+00 : f32
    %29 = vector.broadcast %cst_19 : f32 to vector<16x32xf32>
    %30 = arith.cmpf ogt, %28, %29 : vector<16x32xf32>
    %cst_20 = arith.constant 0.00999999977 : f32
    %31 = vector.broadcast %cst_20 : f32 to vector<16x32xf32>
    %32 = arith.mulf %31, %28 : vector<16x32xf32>
    %33 = arith.select %30, %28, %32 : vector<16x32xi1>, vector<16x32xf32>
    %34 = arith.truncf %33 : vector<16x32xf32> to vector<16x32xbf16>
    %c0_21 = arith.constant 0 : index
    %c0_22 = arith.constant 0 : index
    %35 = vector.load %arg8[%c0_21, %c0_22] : memref<32x128xbf16, #tpu.memory_space<vmem>>, vector<32x128xbf16>
    %cst_23 = arith.constant dense<0.000000e+00> : vector<16x128xf32>
    %36 = tpu.matmul %34, %35, %cst_23 {dimension_numbers = #tpu.dot_dimension_numbers<[1], [0], [0], [1], [0, 0, 1, 1], [], []>} : vector<16x32xbf16>, vector<32x128xbf16>, vector<16x128xf32> -> vector<16x128xf32>
    %c0_24 = arith.constant 0 : index
    %c0_25 = arith.constant 0 : index
    %37 = vector.load %arg9[%c0_24, %c0_25] : memref<1x128xf32, #tpu.memory_space<vmem>>, vector<1x128xf32>
    %38 = vector.broadcast %37 : vector<1x128xf32> to vector<16x128xf32>
    %39 = arith.addf %36, %38 : vector<16x128xf32>
    %40 = arith.truncf %39 : vector<16x128xf32> to vector<16x128xbf16>
    %c0_26 = arith.constant 0 : index
    %c0_27 = arith.constant 0 : index
    %41 = vector.load %arg10[%c0_26, %c0_27] : memref<16x128xbf16, #tpu.memory_space<vmem>>, vector<16x128xbf16>
    tpu.vector_store %arg10[%c0_26, %c0_27], %40 {strides = array<i32>} : memref<16x128xbf16, #tpu.memory_space<vmem>>, vector<16x128xbf16>,
    return
  }
  func.func @transform_0(%arg0: i32) -> (i32, i32) {
    %c0_i32 = arith.constant 0 : i32
    %c0_i32_0 = arith.constant 0 : i32
    return %arg0, %c0_i32 : i32, i32
  }
  func.func @transform_1(%arg0: i32) -> (i32, i32) {
    %c0_i32 = arith.constant 0 : i32
    %c0_i32_0 = arith.constant 0 : i32
    %c0_i32_1 = arith.constant 0 : i32
    return %c0_i32, %c0_i32_0 : i32, i32
  }
  func.func @transform_2(%arg0: i32) -> (i32, i32) {
    %c0_i32 = arith.constant 0 : i32
    %c0_i32_0 = arith.constant 0 : i32
    %c0_i32_1 = arith.constant 0 : i32
    return %c0_i32, %c0_i32_0 : i32, i32
  }
  func.func @transform_3(%arg0: i32) -> (i32, i32) {
    %c0_i32 = arith.constant 0 : i32
    %c0_i32_0 = arith.constant 0 : i32
    %c0_i32_1 = arith.constant 0 : i32
    return %c0_i32, %c0_i32_0 : i32, i32
  }
  func.func @transform_4(%arg0: i32) -> (i32, i32) {
    %c0_i32 = arith.constant 0 : i32
    %c0_i32_0 = arith.constant 0 : i32
    %c0_i32_1 = arith.constant 0 : i32
    return %c0_i32, %c0_i32_0 : i32, i32
  }
  func.func @transform_5(%arg0: i32) -> (i32, i32) {
    %c0_i32 = arith.constant 0 : i32
    %c0_i32_0 = arith.constant 0 : i32
    %c0_i32_1 = arith.constant 0 : i32
    return %c0_i32, %c0_i32_0 : i32, i32
  }
  func.func @transform_6(%arg0: i32) -> (i32, i32) {
    %c0_i32 = arith.constant 0 : i32
    %c0_i32_0 = arith.constant 0 : i32
    %c0_i32_1 = arith.constant 0 : i32
    return %c0_i32, %c0_i32_0 : i32, i32
  }
  func.func @transform_7(%arg0: i32) -> (i32, i32) {
    %c0_i32 = arith.constant 0 : i32
    %c0_i32_0 = arith.constant 0 : i32
    %c0_i32_1 = arith.constant 0 : i32
    return %c0_i32, %c0_i32_0 : i32, i32
  }
  func.func @transform_8(%arg0: i32) -> (i32, i32) {
    %c0_i32 = arith.constant 0 : i32
    %c0_i32_0 = arith.constant 0 : i32
    %c0_i32_1 = arith.constant 0 : i32
    return %c0_i32, %c0_i32_0 : i32, i32
  }
  func.func @transform_9(%arg0: i32) -> (i32, i32) {
    %c0_i32 = arith.constant 0 : i32
    %c0_i32_0 = arith.constant 0 : i32
    return %arg0, %c0_i32 : i32, i32
  }
}

</mosaic_0001>

<llo_original>
// kernel: tpu_custom_call.1
$region0: #{tpu_custom_call.1}
  #allocation0 [shape = 'u32[]', space=smem, size = 0x4, offset = 0x4, fixed_abs, tag = 'smem constant byte address 0x4 - core index']
  #allocation1 [shape = 'u32[72,128]{1,0:T(1,128)}', space=vmem, size = 0x9000, scoped, tag = 'internal scratch']
  %s0 = inlined_call_operand.vmem [shape: f32[16,32], index: 0, kind: input, shape index: {}]
  %s1 = inlined_call_operand.vmem [shape: bf16[32,128], index: 1, kind: input, shape index: {}]
  %s2 = inlined_call_operand.vmem [shape: f32[1,128], index: 2, kind: input, shape index: {}]
  %s3 = inlined_call_operand.vmem [shape: bf16[128,64], index: 3, kind: input, shape index: {}]
  %s4 = inlined_call_operand.vmem [shape: f32[1,64], index: 4, kind: input, shape index: {}]
  %s5 = inlined_call_operand.vmem [shape: bf16[64,32], index: 5, kind: input, shape index: {}]
  %s6 = inlined_call_operand.vmem [shape: f32[1,32], index: 6, kind: input, shape index: {}]
  %s7 = inlined_call_operand.vmem [shape: bf16[32,128], index: 7, kind: input, shape index: {}]
  %s8 = inlined_call_operand.vmem [shape: f32[1,128], index: 8, kind: input, shape index: {}]
  %s9 = inlined_call_operand.hbm [shape: bf16[16,128], index: 9, kind: output, shape index: {}]
  %s10 = sld [smem:[#allocation0]]
  $region46: #{tpu_custom_call.1} parent=0
    _
  %s12 = ssub.s32 1, %s10
  %s13 = scalar_select 0, %s12, %s10
  $region1: #{tpu_custom_call.1} parent=0
    #allocation2 [shape = 'u8[4096]{0}', space=vmem, size = 0x1000, scoped, tag = 'output window, operand 0, single buffered']
    #allocation3 [shape = 's32[1]{0}', space=sflag, size = 0x4, scoped, tag = 'scoped memory for tpu_custom_call.1']
    %14 = vsyncpa [#allocation3], 0
    // Predicated region
    $region2: #{tpu_custom_call.1} parent=1 // pred_check
      _
    $region3: #{tpu_custom_call.1} parent=1 // pred_check_branch
      %16 = sbr.rel (0) target = $region5
    $region4: #{tpu_custom_call.1} parent=1 // pred_region
      _
    $region5: #{tpu_custom_call.1} parent=1 // pred_fallthru
      _
    // Predicated region
    $region6: #{tpu_custom_call.1} parent=1 // pred_check
      _
    $region7: #{tpu_custom_call.1} parent=1 // pred_check_branch
      %18 = sbr.rel (0) target = $region9
    $region8: #{tpu_custom_call.1} parent=1 // pred_region
      _
    $region9: #{tpu_custom_call.1} parent=1 // pred_fallthru
      _
    // Predicated region
    $region10: #{tpu_custom_call.1} parent=1 // pred_check
      _
    $region11: #{tpu_custom_call.1} parent=1 // pred_check_branch
      %20 = sbr.rel (0) target = $region13
    $region12: #{tpu_custom_call.1} parent=1 // pred_region
      _
    $region13: #{tpu_custom_call.1} parent=1 // pred_fallthru
      _
    // Predicated region
    $region14: #{tpu_custom_call.1} parent=1 // pred_check
      _
    $region15: #{tpu_custom_call.1} parent=1 // pred_check_branch
      %22 = sbr.rel (0) target = $region17
    $region16: #{tpu_custom_call.1} parent=1 // pred_region
      _
    $region17: #{tpu_custom_call.1} parent=1 // pred_fallthru
      _
    // Predicated region
    $region18: #{tpu_custom_call.1} parent=1 // pred_check
      _
    $region19: #{tpu_custom_call.1} parent=1 // pred_check_branch
      %24 = sbr.rel (0) target = $region21
    $region20: #{tpu_custom_call.1} parent=1 // pred_region
      _
    $region21: #{tpu_custom_call.1} parent=1 // pred_fallthru
      _
    // Predicated region
    $region22: #{tpu_custom_call.1} parent=1 // pred_check
      _
    $region23: #{tpu_custom_call.1} parent=1 // pred_check_branch
      %26 = sbr.rel (0) target = $region25
    $region24: #{tpu_custom_call.1} parent=1 // pred_region
      _
    $region25: #{tpu_custom_call.1} parent=1 // pred_fallthru
      _
    // Predicated region
    $region26: #{tpu_custom_call.1} parent=1 // pred_check
      _
    $region27: #{tpu_custom_call.1} parent=1 // pred_check_branch
      %28 = sbr.rel (0) target = $region29
    $region28: #{tpu_custom_call.1} parent=1 // pred_region
      _
    $region29: #{tpu_custom_call.1} parent=1 // pred_fallthru
      _
    // Predicated region
    $region30: #{tpu_custom_call.1} parent=1 // pred_check
      _
    $region31: #{tpu_custom_call.1} parent=1 // pred_check_branch
      %30 = sbr.rel (0) target = $region33
    $region32: #{tpu_custom_call.1} parent=1 // pred_region
      _
    $region33: #{tpu_custom_call.1} parent=1 // pred_fallthru
      _
    // Predicated region
    $region34: #{tpu_custom_call.1} parent=1 // pred_check
      _
    $region35: #{tpu_custom_call.1} parent=1 // pred_check_branch
      %32 = sbr.rel (0) target = $region37
    $region36: #{tpu_custom_call.1} parent=1 // pred_region
      _
    $region37: #{tpu_custom_call.1} parent=1 // pred_fallthru
      _
    %v34 = vld [vmem:[%s0] sm:$0xff]
    %v35 = vld [vmem:[%s0 + $0x8] sm:$0xff]
    %v36 = vpack.c.bf16 %v35, %v34
    %v37 = vld [vmem:[%s1] sm:$0xf]
    %v38 = vld [vmem:[%s1 + $0x4] sm:$0xf]
    %v39 = vld [vmem:[%s1 + $0x8] sm:$0xf]
    %v40 = vld [vmem:[%s1 + $0xc] sm:$0xf]
    %v41 = vld [vmem:[%s2] sm:$0x1]
    %v43 = vperm.slane %v41, 0
    %v49 = vunpack.c.l.b16 %v37
    %v50 = vunpack.c.l.b16 %v38
    %v51 = vunpack.c.l.b16 %v39
    %v52 = vunpack.c.l.b16 %v40
    %v53 = vpack.c.b16 %v50, %v49
    %v54 = vpack.c.b16 %v52, %v51
    %vm57 = vcmask 261120
    %v59 = vsel %vm57, %v36, 0
    %61 = vmatpush.bf16.msra.mxu0 0
    %62 = vmatpush.bf16.msra.mxu0 0
    %63 = vmatpush.bf16.msra.mxu0 0
    %64 = vmatpush.bf16.msra.mxu0 0
    %65 = vmatpush.bf16.msra.mxu0 0
    %66 = vmatpush.bf16.msra.mxu0 0
    %67 = vmatpush.bf16.msra.mxu0 %v54
    %68 = vmatpush.bf16.msra.mxu0 %v53
    %69 = vmatmul.bf16.gmra.mxu0 %v59
    %v70 = vpop.f32.mrf.mxu0
    %v71 = vadd.f32 %v43, %v70
    %v72 = vpop.f32.mrf.mxu0
    %v73 = vadd.f32 %v43, %v72
    %74 = vdwg.mxu0
    %vm75 = vcmp.gt.f32.partialorder %v71, 0.0
    %vm76 = vcmp.gt.f32.partialorder %v73, 0.0
    %v77 = vmul.f32 %v71, 0.01
    %v78 = vmul.f32 %v73, 0.01
    %v79 = vsel %vm75, %v71, %v77
    %v80 = vsel %vm76, %v73, %v78
    %v81 = vpack.c.bf16 %v80, %v79
    %v82 = vld [vmem:[%s3] sm:$0xf]
    %v83 = vld [vmem:[%s3 + $0x4] sm:$0xf]
    %v84 = vld [vmem:[%s3 + $0x8] sm:$0xf]
    %v85 = vld [vmem:[%s3 + $0xc] sm:$0xf]
    %v86 = vld [vmem:[%s3 + $0x10] sm:$0xf]
    %v87 = vld [vmem:[%s3 + $0x14] sm:$0xf]
    %v88 = vld [vmem:[%s3 + $0x18] sm:$0xf]
    %v89 = vld [vmem:[%s3 + $0x1c] sm:$0xf]
    %v90 = vld [vmem:[%s3 + $0x20] sm:$0xf]
    %v91 = vld [vmem:[%s3 + $0x24] sm:$0xf]
    %v92 = vld [vmem:[%s3 + $0x28] sm:$0xf]
    %v93 = vld [vmem:[%s3 + $0x2c] sm:$0xf]
    %v94 = vld [vmem:[%s3 + $0x30] sm:$0xf]
    %v95 = vld [vmem:[%s3 + $0x34] sm:$0xf]
    %v96 = vld [vmem:[%s3 + $0x38] sm:$0xf]
    %v97 = vld [vmem:[%s3 + $0x3c] sm:$0xf]
    %v98 = vld [vmem:[%s4] sm:$0x1]
    %v100 = vperm.slane %v98, 0
    %v118 = vunpack.c.l.b16 %v82
    %v119 = vunpack.c.l.b16 %v83
    %v120 = vunpack.c.l.b16 %v84
    %v121 = vunpack.c.l.b16 %v85
    %v122 = vunpack.c.l.b16 %v86
    %v123 = vunpack.c.l.b16 %v87
    %v124 = vunpack.c.l.b16 %v88
    %v125 = vunpack.c.l.b16 %v89
    %v126 = vunpack.c.l.b16 %v90
    %v127 = vunpack.c.l.b16 %v91
    %v128 = vunpack.c.l.b16 %v92
    %v129 = vunpack.c.l.b16 %v93
    %v130 = vunpack.c.l.b16 %v94
    %v131 = vunpack.c.l.b16 %v95
    %v132 = vunpack.c.l.b16 %v96
    %v133 = vunpack.c.l.b16 %v97
    %v134 = vpack.c.b16 %v119, %v118
    %v135 = vpack.c.b16 %v121, %v120
    %v136 = vpack.c.b16 %v123, %v122
    %v137 = vpack.c.b16 %v125, %v124
    %v138 = vpack.c.b16 %v127, %v126
    %v139 = vpack.c.b16 %v129, %v128
    %v140 = vpack.c.b16 %v131, %v130
    %v141 = vpack.c.b16 %v133, %v132
    %150 = vmatpush.bf16.msra.mxu0 %v141
    %151 = vmatpush.bf16.msra.mxu0 %v140
    %152 = vmatpush.bf16.msra.mxu0 %v139
    %153 = vmatpush.bf16.msra.mxu0 %v138
    %154 = vmatpush.bf16.msra.mxu0 %v137
    %155 = vmatpush.bf16.msra.mxu0 %v136
    %156 = vmatpush.bf16.msra.mxu0 %v135
    %157 = vmatpush.bf16.msra.mxu0 %v134
    %158 = vmatmul.bf16.gmra.mxu0 %v81
    %v159 = vpop.f32.mrf.mxu0
    %v160 = vadd.f32 %v100, %v159
    %v161 = vpop.f32.mrf.mxu0
    %v162 = vadd.f32 %v100, %v161
    %163 = vdwg.mxu0
    %vm164 = vcmp.gt.f32.partialorder %v160, 0.0
    %vm165 = vcmp.gt.f32.partialorder %v162, 0.0
    %v166 = vmul.f32 %v160, 0.01
    %v167 = vmul.f32 %v162, 0.01
    %v168 = vsel %vm164, %v160, %v166
    %v169 = vsel %vm165, %v162, %v167
    %v170 = vpack.c.bf16 %v169, %v168
    %v171 = vld [vmem:[%s5] sm:$0xf]
    %v172 = vld [vmem:[%s5 + $0x4] sm:$0xf]
    %v173 = vld [vmem:[%s5 + $0x8] sm:$0xf]
    %v174 = vld [vmem:[%s5 + $0xc] sm:$0xf]
    %v175 = vld [vmem:[%s5 + $0x10] sm:$0xf]
    %v176 = vld [vmem:[%s5 + $0x14] sm:$0xf]
    %v177 = vld [vmem:[%s5 + $0x18] sm:$0xf]
    %v178 = vld [vmem:[%s5 + $0x1c] sm:$0xf]
    %v179 = vld [vmem:[%s6] sm:$0x1]
    %v181 = vperm.slane %v179, 0
    %v191 = vunpack.c.l.b16 %v171
    %v192 = vunpack.c.l.b16 %v172
    %v193 = vunpack.c.l.b16 %v173
    %v194 = vunpack.c.l.b16 %v174
    %v195 = vunpack.c.l.b16 %v175
    %v196 = vunpack.c.l.b16 %v176
    %v197 = vunpack.c.l.b16 %v177
    %v198 = vunpack.c.l.b16 %v178
    %v199 = vpack.c.b16 %v192, %v191
    %v200 = vpack.c.b16 %v194, %v193
    %v201 = vpack.c.b16 %v196, %v195
    %v202 = vpack.c.b16 %v198, %v197
    %vm207 = vcmask 523264
    %v209 = vsel %vm207, %v170, 0
    %211 = vmatpush.bf16.msra.mxu0 0
    %212 = vmatpush.bf16.msra.mxu0 0
    %213 = vmatpush.bf16.msra.mxu0 0
    %214 = vmatpush.bf16.msra.mxu0 0
    %215 = vmatpush.bf16.msra.mxu0 %v202
    %216 = vmatpush.bf16.msra.mxu0 %v201
    %217 = vmatpush.bf16.msra.mxu0 %v200
    %218 = vmatpush.bf16.msra.mxu0 %v199
    %219 = vmatmul.bf16.gmra.mxu0 %v209
    %v220 = vpop.f32.mrf.mxu0
    %v221 = vadd.f32 %v181, %v220
    %v222 = vpop.f32.mrf.mxu0
    %v223 = vadd.f32 %v181, %v222
    %224 = vdwg.mxu0
    %vm225 = vcmp.gt.f32.partialorder %v221, 0.0
    %vm226 = vcmp.gt.f32.partialorder %v223, 0.0
    %v227 = vmul.f32 %v221, 0.01
    %v228 = vmul.f32 %v223, 0.01
    %v229 = vsel %vm225, %v221, %v227
    %v230 = vsel %vm226, %v223, %v228
    %v231 = vpack.c.bf16 %v230, %v229
    %v232 = vld [vmem:[%s7] sm:$0xf]
    %v233 = vld [vmem:[%s7 + $0x4] sm:$0xf]
    %v234 = vld [vmem:[%s7 + $0x8] sm:$0xf]
    %v235 = vld [vmem:[%s7 + $0xc] sm:$0xf]
    %v236 = vld [vmem:[%s8] sm:$0x1]
    %v238 = vperm.slane %v236, 0
    %v244 = vunpack.c.l.b16 %v232
    %v245 = vunpack.c.l.b16 %v233
    %v246 = vunpack.c.l.b16 %v234
    %v247 = vunpack.c.l.b16 %v235
    %v248 = vpack.c.b16 %v245, %v244
    %v249 = vpack.c.b16 %v247, %v246
    %v253 = vsel %vm57, %v231, 0
    %255 = vmatpush.bf16.msra.mxu0 0
    %256 = vmatpush.bf16.msra.mxu0 0
    %257 = vmatpush.bf16.msra.mxu0 0
    %258 = vmatpush.bf16.msra.mxu0 0
    %259 = vmatpush.bf16.msra.mxu0 0
    %260 = vmatpush.bf16.msra.mxu0 0
    %261 = vmatpush.bf16.msra.mxu0 %v249
    %262 = vmatpush.bf16.msra.mxu0 %v248
    %263 = vmatmul.bf16.gmra.mxu0 %v253
    %v264 = vpop.f32.mrf.mxu0
    %v265 = vadd.f32 %v238, %v264
    %v266 = vpop.f32.mrf.mxu0
    %v267 = vadd.f32 %v238, %v266
    %268 = vdwg.mxu0
    %v269 = vpack.c.bf16 %v265, %v265
    %v270 = vpack.c.bf16 %v267, %v267
    %271 = vst [vmem:[#allocation2] sm:$0xf] %v269
    %272 = vst [vmem:[#allocation2 + $0x4] sm:$0xf] %v270
    // Predicated region
    $region38: #{tpu_custom_call.1} parent=1 // pred_check
      _
    $region39: #{tpu_custom_call.1} parent=1 // pred_check_branch
      %274 = sbr.rel (0) target = $region41
    $region40: #{tpu_custom_call.1} parent=1 // pred_region
      %276 = vsyncadd [#allocation3], 0
      %s277 = sshll.u32 [#allocation2], 4
      %s278 = int_to_ptr.vmem [resolvable:$true] %s277
      %s279 = sshll.u32 %s9, 4
      %s280 = int_to_ptr.hbm [resolvable:$true] %s279
      %285 = dma.vmem_to_hbm [thread:$0]  %s278, 128, %s280, [#allocation3], 64, 64, 4
    $region41: #{tpu_custom_call.1} parent=1 // pred_fallthru
      _
    // Predicated region
    $region42: #{tpu_custom_call.1} parent=1 // pred_check
      _
    $region43: #{tpu_custom_call.1} parent=1 // pred_check_branch
      %287 = sbr.rel (0) target = $region45
    $region44: #{tpu_custom_call.1} parent=1 // pred_region
      %289 = dma.done [#allocation3], 128
    $region45: #{tpu_custom_call.1} parent=1 // pred_fallthru
      _
    %290 = vsyncpa [#allocation3], 1

</llo_original>
